<compile_context>
chip_gen: v6e
topology: v6e:2x2x1
jax: 0.10.0
libtpu: 0.0.40
codegen_flags: <defaults>
</compile_context>

<pallas_src>
import functools

import jax
import jax.numpy as jnp
from jax import lax
from jax.experimental import pallas as pl
from jax.experimental.pallas import tpu as pltpu


def encoder_kernel(x_ref, w1_ref, b1_ref, w2_ref, b2_ref, w3_ref, b3_ref,
                   mu_ref, sig_ref, *, z_size):
    # x_ref: [TILE_B, x_size] bf16 (native batch-major layout, no host transpose).
    # Layer 1: h = relu(W1 @ X^T + b1) -> [h0, TILE_B] (lane-dense, batch on lanes).
    dn = (((1,), (1,)), ((), ()))  # contract dim 1 of W1 with dim 1 of x
    h = lax.dot_general(w1_ref[...], x_ref[...], dn,
                        preferred_element_type=jnp.float32)
    h = jnp.maximum(h + b1_ref[...], 0.0).astype(jnp.bfloat16)
    # Layer 2: relu(W2 @ h + b2)
    h = jnp.dot(w2_ref[...], h, preferred_element_type=jnp.float32)
    h = jnp.maximum(h + b2_ref[...], 0.0).astype(jnp.bfloat16)
    # Layer 3 (fused head): a = W3 @ h + b3 -> [2z, TILE_B] f32; the z-split is a
    # sublane slice (tile-aligned for z % 8 == 0), not a lane slice -> free.
    a = jnp.dot(w3_ref[...], h, preferred_element_type=jnp.float32) + b3_ref[...]
    mu_ref[...] = a[:z_size]
    t = a[z_size:]
    # softplus(t) = max(t,0) + log1p(exp(-|t|))  (numerically stable, EUP exp/log)
    sig_ref[...] = jnp.maximum(t, 0.0) + jnp.log1p(jnp.exp(-jnp.abs(t)))


@functools.partial(jax.jit, static_argnames=("z_size", "tile_b"))
def encoder_forward(x, params, *, z_size, tile_b=None):
    """x: [B, x_size] f32.  Returns (mu, sigma), each [B, z_size] f32."""
    w1, b1, w2, b2, w3, b3 = params
    B, x_size = x.shape
    h0 = w1.shape[0]
    h1 = w2.shape[0]

    # Tile selection: few fat tiles (amortize per-grid-step overhead on
    # single-TC v5e/v6e) but an even grid >= 2 so both v7x TCs get work.
    MAX_TILE = 2048
    if tile_b is None:
        if B <= 2 * MAX_TILE:
            b_pad = 256 * pl.cdiv(B, 256)
            tile_b = b_pad // 2
        else:
            tile_b = MAX_TILE
            b_pad = (2 * MAX_TILE) * pl.cdiv(B, 2 * MAX_TILE)
    else:
        b_pad = tile_b * pl.cdiv(B, tile_b)
    num_tiles = b_pad // tile_b

    # Wrapper-side work is just a cast + pad on the batch axis (no transpose).
    xp = jnp.pad(x.astype(jnp.bfloat16), ((0, b_pad - B), (0, 0)))

    def resident(arr):  # weights/biases: constant block index -> stay in VMEM
        return pl.BlockSpec(arr.shape, lambda i: (0, 0))

    out_spec = pl.BlockSpec((z_size, tile_b), lambda i: (0, i))

    flops = 2 * b_pad * (x_size * h0 + h0 * h1 + h1 * 2 * z_size)
    bytes_accessed = (
        xp.size * 2
        + sum(int(p.size) * p.dtype.itemsize for p in params)
        + 2 * b_pad * z_size * 4
    )
    cost = pl.CostEstimate(
        flops=flops,
        transcendentals=2 * b_pad * z_size,   # exp + log1p per sigma element
        bytes_accessed=bytes_accessed,
    )

    mu_t, sig_t = pl.pallas_call(
        functools.partial(encoder_kernel, z_size=z_size),
        out_shape=(
            jax.ShapeDtypeStruct((z_size, b_pad), jnp.float32),
            jax.ShapeDtypeStruct((z_size, b_pad), jnp.float32),
        ),
        grid=(num_tiles,),
        in_specs=[
            pl.BlockSpec((tile_b, x_size), lambda i: (i, 0)),  # streamed x tiles
            resident(w1), resident(b1),
            resident(w2), resident(b2),
            resident(w3), resident(b3),
        ],
        out_specs=(out_spec, out_spec),
        compiler_params=pltpu.CompilerParams(
            dimension_semantics=("parallel",),      # shard batch tiles over v7x's 2 TCs
            vmem_limit_bytes=32 * 1024 * 1024,      # safe on v7x's 64 MiB physical VMEM
        ),
        cost_estimate=cost,
    )(xp, w1, b1, w2, b2, w3, b3)

    # Small [z, B] -> [B, z] transposes (z=16): negligible vs. kernel cost.
    return mu_t[:, :B].T, sig_t[:, :B].T


def init_params(key, x_size, h_sizes, z_size):
    """PyTorch-native [out, in] weights (bf16) and (out, 1) biases (f32);
    final layer kept fused as [2*z, h1] (mu rows first, then sigma rows)."""
    h0, h1 = h_sizes
    shapes = [(h0, x_size), (h1, h0), (2 * z_size, h1)]
    ws, bs = [], []
    for fo, fi in shapes:
        key, kw, kb = jax.random.split(key, 3)
        bound = 1.0 / jnp.sqrt(fi)  # same scale as nn.Linear's default init
        ws.append(jax.random.uniform(kw, (fo, fi), jnp.float32, -bound, bound))
        bs.append(jax.random.uniform(kb, (fo, 1), jnp.float32, -bound, bound))
    w1, w2, w3 = ws
    b1, b2, b3 = bs
    bf = lambda w: w.astype(jnp.bfloat16)
    return (bf(w1), b1, bf(w2), b2, bf(w3), b3)


def encoder_ref(x, params, z_size):
    """Plain-JAX reference emulating the kernel's precision: bf16 inputs /
    inter-layer activations, f32 matmul accumulation, f32 bias/ReLU/softplus."""
    w1, b1, w2, b2, w3, b3 = params
    f32 = lambda a: a.astype(jnp.float32)
    rnd = lambda a: a.astype(jnp.bfloat16).astype(jnp.float32)
    h = rnd(x)
    h = rnd(jnp.maximum(h @ f32(w1).T + b1.T, 0.0))
    h = rnd(jnp.maximum(h @ f32(w2).T + b2.T, 0.0))
    a = h @ f32(w3).T + b3.T
    return a[:, :z_size], jax.nn.softplus(a[:, z_size:])


if __name__ == "__main__":
    x_size, h_sizes, z_size = 32, [64, 64], 16
    B = 512  # auto tiling -> b_pad=512, tile_b=256, grid of 2 (even, v7x-friendly)

    key = jax.random.PRNGKey(0)
    kx, kp = jax.random.split(key)
    x = jax.random.normal(kx, (B, x_size), jnp.float32)
    params = init_params(kp, x_size, h_sizes, z_size)

    mu, sig = encoder_forward(x, params, z_size=z_size)
    jax.block_until_ready((mu, sig))

    mu_r, sig_r = encoder_ref(x, params, z_size)
    assert mu.shape == (B, z_size) and sig.shape == (B, z_size)
    assert bool(jnp.all(sig >= 0.0))
    assert jnp.allclose(mu, mu_r, atol=5e-4, rtol=5e-4), float(jnp.max(jnp.abs(mu - mu_r)))
    assert jnp.allclose(sig, sig_r, atol=5e-4, rtol=5e-4), float(jnp.max(jnp.abs(sig - sig_r)))

    print("KERNEL_OK")
</pallas_src>

<mosaic_0001>
module attributes {stable_mosaic.version = 11 : i64} {
  func.func @encoder_kernel(%arg0: i32, %arg1: memref<256x32xbf16, #tpu.memory_space<vmem>>, %arg2: memref<64x32xbf16, #tpu.memory_space<vmem>>, %arg3: memref<64x1xf32, #tpu.memory_space<vmem>>, %arg4: memref<64x64xbf16, #tpu.memory_space<vmem>>, %arg5: memref<64x1xf32, #tpu.memory_space<vmem>>, %arg6: memref<32x64xbf16, #tpu.memory_space<vmem>>, %arg7: memref<32x1xf32, #tpu.memory_space<vmem>>, %arg8: memref<16x256xf32, #tpu.memory_space<vmem>>, %arg9: memref<16x256xf32, #tpu.memory_space<vmem>>) attributes {dimension_semantics = [#tpu.dimension_semantics<parallel>], iteration_bounds = array<i64: 2>, scalar_prefetch = 0 : i64, scratch_operands = 0 : i64, tpu.core_type = #tpu.core_type<tc>, window_params = [{transform_indices = @transform_0, window_bounds = array<i64: 256, 32>}, {pipeline_mode = #tpu.pipeline_mode<synchronous>, transform_indices = @transform_1, window_bounds = array<i64: 64, 32>}, {pipeline_mode = #tpu.pipeline_mode<synchronous>, transform_indices = @transform_2, window_bounds = array<i64: 64, 1>}, {pipeline_mode = #tpu.pipeline_mode<synchronous>, transform_indices = @transform_3, window_bounds = array<i64: 64, 64>}, {pipeline_mode = #tpu.pipeline_mode<synchronous>, transform_indices = @transform_4, window_bounds = array<i64: 64, 1>}, {pipeline_mode = #tpu.pipeline_mode<synchronous>, transform_indices = @transform_5, window_bounds = array<i64: 32, 64>}, {pipeline_mode = #tpu.pipeline_mode<synchronous>, transform_indices = @transform_6, window_bounds = array<i64: 32, 1>}, {transform_indices = @transform_7, window_bounds = array<i64: 16, 256>}, {transform_indices = @transform_8, window_bounds = array<i64: 16, 256>}]} {
    %c0 = arith.constant 0 : index
    %c0_0 = arith.constant 0 : index
    %0 = vector.load %arg2[%c0, %c0_0] : memref<64x32xbf16, #tpu.memory_space<vmem>>, vector<64x32xbf16>
    %c0_1 = arith.constant 0 : index
    %c0_2 = arith.constant 0 : index
    %1 = vector.load %arg1[%c0_1, %c0_2] : memref<256x32xbf16, #tpu.memory_space<vmem>>, vector<256x32xbf16>
    %cst = arith.constant dense<0.000000e+00> : vector<64x256xf32>
    %2 = tpu.matmul %0, %1, %cst {dimension_numbers = #tpu.dot_dimension_numbers<[1], [1], [0], [0], [0, 0, 1, 0], [], []>} : vector<64x32xbf16>, vector<256x32xbf16>, vector<64x256xf32> -> vector<64x256xf32>
    %c0_3 = arith.constant 0 : index
    %c0_4 = arith.constant 0 : index
    %3 = vector.load %arg3[%c0_3, %c0_4] : memref<64x1xf32, #tpu.memory_space<vmem>>, vector<64x1xf32>
    %4 = vector.broadcast %3 : vector<64x1xf32> to vector<64x256xf32>
    %5 = arith.addf %2, %4 : vector<64x256xf32>
    %cst_5 = arith.constant 0.000000e+00 : f32
    %6 = vector.broadcast %cst_5 : f32 to vector<64x256xf32>
    %7 = arith.maximumf %5, %6 : vector<64x256xf32>
    %8 = arith.truncf %7 : vector<64x256xf32> to vector<64x256xbf16>
    %c0_6 = arith.constant 0 : index
    %c0_7 = arith.constant 0 : index
    %9 = vector.load %arg4[%c0_6, %c0_7] : memref<64x64xbf16, #tpu.memory_space<vmem>>, vector<64x64xbf16>
    %cst_8 = arith.constant dense<0.000000e+00> : vector<64x256xf32>
    %10 = tpu.matmul %9, %8, %cst_8 {dimension_numbers = #tpu.dot_dimension_numbers<[1], [0], [0], [1], [0, 0, 1, 1], [], []>} : vector<64x64xbf16>, vector<64x256xbf16>, vector<64x256xf32> -> vector<64x256xf32>
    %c0_9 = arith.constant 0 : index
    %c0_10 = arith.constant 0 : index
    %11 = vector.load %arg5[%c0_9, %c0_10] : memref<64x1xf32, #tpu.memory_space<vmem>>, vector<64x1xf32>
    %12 = vector.broadcast %11 : vector<64x1xf32> to vector<64x256xf32>
    %13 = arith.addf %10, %12 : vector<64x256xf32>
    %cst_11 = arith.constant 0.000000e+00 : f32
    %14 = vector.broadcast %cst_11 : f32 to vector<64x256xf32>
    %15 = arith.maximumf %13, %14 : vector<64x256xf32>
    %16 = arith.truncf %15 : vector<64x256xf32> to vector<64x256xbf16>
    %c0_12 = arith.constant 0 : index
    %c0_13 = arith.constant 0 : index
    %17 = vector.load %arg6[%c0_12, %c0_13] : memref<32x64xbf16, #tpu.memory_space<vmem>>, vector<32x64xbf16>
    %cst_14 = arith.constant dense<0.000000e+00> : vector<32x256xf32>
    %18 = tpu.matmul %17, %16, %cst_14 {dimension_numbers = #tpu.dot_dimension_numbers<[1], [0], [0], [1], [0, 0, 1, 1], [], []>} : vector<32x64xbf16>, vector<64x256xbf16>, vector<32x256xf32> -> vector<32x256xf32>
    %c0_15 = arith.constant 0 : index
    %c0_16 = arith.constant 0 : index
    %19 = vector.load %arg7[%c0_15, %c0_16] : memref<32x1xf32, #tpu.memory_space<vmem>>, vector<32x1xf32>
    %20 = vector.broadcast %19 : vector<32x1xf32> to vector<32x256xf32>
    %21 = arith.addf %18, %20 : vector<32x256xf32>
    %22 = vector.extract_strided_slice %21 {offsets = [0, 0], sizes = [16, 256], strides = [1, 1]} : vector<32x256xf32> to vector<16x256xf32>
    %c0_17 = arith.constant 0 : index
    %c0_18 = arith.constant 0 : index
    %23 = vector.load %arg8[%c0_17, %c0_18] : memref<16x256xf32, #tpu.memory_space<vmem>>, vector<16x256xf32>
    tpu.vector_store %arg8[%c0_17, %c0_18], %22 {strides = array<i32>} : memref<16x256xf32, #tpu.memory_space<vmem>>, vector<16x256xf32>,
    %24 = vector.extract_strided_slice %21 {offsets = [16, 0], sizes = [16, 256], strides = [1, 1]} : vector<32x256xf32> to vector<16x256xf32>
    %cst_19 = arith.constant 0.000000e+00 : f32
    %25 = vector.broadcast %cst_19 : f32 to vector<16x256xf32>
    %26 = arith.maximumf %24, %25 : vector<16x256xf32>
    %27 = math.absf %24 : vector<16x256xf32>
    %cst_20 = arith.constant 0.000000e+00 : f32
    %28 = vector.broadcast %cst_20 : f32 to vector<16x256xf32>
    %29 = arith.subf %28, %27 : vector<16x256xf32>
    %30 = math.exp %29 : vector<16x256xf32>
    %31 = math.log1p %30 : vector<16x256xf32>
    %32 = arith.addf %26, %31 : vector<16x256xf32>
    %c0_21 = arith.constant 0 : index
    %c0_22 = arith.constant 0 : index
    %33 = vector.load %arg9[%c0_21, %c0_22] : memref<16x256xf32, #tpu.memory_space<vmem>>, vector<16x256xf32>
    tpu.vector_store %arg9[%c0_21, %c0_22], %32 {strides = array<i32>} : memref<16x256xf32, #tpu.memory_space<vmem>>, vector<16x256xf32>,
    return
  }
  func.func @transform_0(%arg0: i32) -> (i32, i32) {
    %c0_i32 = arith.constant 0 : i32
    %c0_i32_0 = arith.constant 0 : i32
    return %arg0, %c0_i32 : i32, i32
  }
  func.func @transform_1(%arg0: i32) -> (i32, i32) {
    %c0_i32 = arith.constant 0 : i32
    %c0_i32_0 = arith.constant 0 : i32
    %c0_i32_1 = arith.constant 0 : i32
    return %c0_i32, %c0_i32_0 : i32, i32
  }
  func.func @transform_2(%arg0: i32) -> (i32, i32) {
    %c0_i32 = arith.constant 0 : i32
    %c0_i32_0 = arith.constant 0 : i32
    %c0_i32_1 = arith.constant 0 : i32
    return %c0_i32, %c0_i32_0 : i32, i32
  }
  func.func @transform_3(%arg0: i32) -> (i32, i32) {
    %c0_i32 = arith.constant 0 : i32
    %c0_i32_0 = arith.constant 0 : i32
    %c0_i32_1 = arith.constant 0 : i32
    return %c0_i32, %c0_i32_0 : i32, i32
  }
  func.func @transform_4(%arg0: i32) -> (i32, i32) {
    %c0_i32 = arith.constant 0 : i32
    %c0_i32_0 = arith.constant 0 : i32
    %c0_i32_1 = arith.constant 0 : i32
    return %c0_i32, %c0_i32_0 : i32, i32
  }
  func.func @transform_5(%arg0: i32) -> (i32, i32) {
    %c0_i32 = arith.constant 0 : i32
    %c0_i32_0 = arith.constant 0 : i32
    %c0_i32_1 = arith.constant 0 : i32
    return %c0_i32, %c0_i32_0 : i32, i32
  }
  func.func @transform_6(%arg0: i32) -> (i32, i32) {
    %c0_i32 = arith.constant 0 : i32
    %c0_i32_0 = arith.constant 0 : i32
    %c0_i32_1 = arith.constant 0 : i32
    return %c0_i32, %c0_i32_0 : i32, i32
  }
  func.func @transform_7(%arg0: i32) -> (i32, i32) {
    %c0_i32 = arith.constant 0 : i32
    %c0_i32_0 = arith.constant 0 : i32
    return %c0_i32, %arg0 : i32, i32
  }
  func.func @transform_8(%arg0: i32) -> (i32, i32) {
    %c0_i32 = arith.constant 0 : i32
    %c0_i32_0 = arith.constant 0 : i32
    return %c0_i32, %arg0 : i32, i32
  }
}

</mosaic_0001>

<llo_original>
// kernel: encoder_forward.1
$region0: #{encoder_forward.1}
  #allocation0 [shape = 'u32[]', space=smem, size = 0x4, offset = 0x4, fixed_abs, tag = 'smem constant byte address 0x4 - core index']
  #allocation1 [shape = 'u32[144,128]{1,0:T(1,128)}', space=vmem, size = 0x12000, scoped, tag = 'internal scratch']
  %s0 = inlined_call_operand.vmem [shape: bf16[512,32], index: 0, kind: input, shape index: {}]
  %s1 = inlined_call_operand.vmem [shape: bf16[64,32], index: 1, kind: input, shape index: {}]
  %s2 = inlined_call_operand.vmem [shape: f32[64,1], index: 2, kind: input, shape index: {}]
  %s3 = inlined_call_operand.vmem [shape: bf16[64,64], index: 3, kind: input, shape index: {}]
  %s4 = inlined_call_operand.vmem [shape: f32[64,1], index: 4, kind: input, shape index: {}]
  %s5 = inlined_call_operand.vmem [shape: bf16[32,64], index: 5, kind: input, shape index: {}]
  %s6 = inlined_call_operand.vmem [shape: f32[32,1], index: 6, kind: input, shape index: {}]
  %s7 = inlined_call_operand.hbm [shape: f32[16,512], index: 7, kind: output, shape index: {0}]
  %s8 = inlined_call_operand.hbm [shape: f32[16,512], index: 8, kind: output, shape index: {1}]
  %9 = xla_tuple %s7, %s8
  %s10 = sld [smem:[#allocation0]]
  $region69: #{encoder_forward.1} parent=0
    _
  %s12 = ssub.s32 1, %s10
  %s13 = scalar_select 0, %s12, %s10
  $region1: #{encoder_forward.1} parent=0
    #allocation2 [shape = 'u8[32768]{0}', space=vmem, size = 0x8000, scoped, tag = 'output window, operand 0']
    #allocation3 [shape = 's32[2]{0}', space=sflag, size = 0x8, scoped, tag = 'scoped memory for encoder_forward.1']
    #allocation4 [shape = 'u8[32768]{0}', space=vmem, size = 0x8000, scoped, tag = 'output window, operand 1']
    #allocation5 [shape = 's32[2]{0}', space=sflag, size = 0x8, scoped, tag = 'scoped memory for encoder_forward.1']
    %14 = vsyncpa [#allocation3], 0
    %s15 = scalar_lea.sflag [#allocation3], 1
    %16 = vsyncpa %s15, 0
    %17 = vsyncpa [#allocation5], 0
    %s18 = scalar_lea.sflag [#allocation5], 1
    %19 = vsyncpa %s18, 0
    loop: start=0, step=1, limit=4
    $region2: #{encoder_forward.1} parent=1 // loop_pre_header
      _
    $region3: #{encoder_forward.1} parent=1 // loop_header
      %s21 = sphi 0, %s25
      %p22 = scmp.ge.s32.totalorder %s21, 4
      %s31 = sphi 0, %s33
      %s34 = sphi 0, %s31
      %s35 = sphi 0, %s34
      %s51 = sphi 0, %s35
      %s55 = sphi 0, %s55
      %s57 = sphi 0, %s55
      %s58 = sphi 0, %s57
      %s72 = sphi 0, %s58
      %s76 = sphi 0, %s76
      %s78 = sphi 0, %s76
      %s79 = sphi 0, %s78
      %s93 = sphi 0, %s79
      %s97 = sphi 0, %s97
      %s99 = sphi 0, %s97
      %s100 = sphi 0, %s99
      %s114 = sphi 0, %s100
      %s118 = sphi 0, %s118
      %s120 = sphi 0, %s118
      %s121 = sphi 0, %s120
      %s135 = sphi 0, %s121
      %s139 = sphi 0, %s139
      %s141 = sphi 0, %s139
      %s142 = sphi 0, %s141
      %s156 = sphi 0, %s142
      %s160 = sphi 0, %s160
      %s162 = sphi 0, %s160
      %s163 = sphi 0, %s162
      %s177 = sphi 0, %s163
      %s183 = sphi 0, %s185
      %s186 = sphi 0, %s183
      %s187 = sphi 0, %s186
      %s203 = sphi 0, %s187
      %s209 = sphi 0, %s211
      %s212 = sphi 0, %s209
      %s213 = sphi 0, %s212
      %s229 = sphi 0, %s213
    $region4: #{encoder_forward.1} parent=1 // loop_header_branch
      %24 = sbr.rel (%p22) target = $region8
    $region5: #{encoder_forward.1} parent=1 // loop_body
      %s26 = ssub.s32 %s21, 1
      %s27 = ssub.s32 %s21, 2
      %s28 = sadd.s32 %s21, 1
      %s29 = ssub.s32 %s21, %s28
      %p30 = scmp.eq.s32.totalorder %s29, 0
      %s32 = sadd.s32 %s31, 1
      %s33 = scalar_select %p30, %s31, %s32
      %p36 = pneg %p30
      %p37 = scmp.eq.s32.totalorder %s21, 1
      %p38 = por %p36, %p37
      %p39 = scmp.ne.s32.totalorder %s31, %s34
      %p40 = scmp.eq.s32.totalorder %s21, 0
      %p41 = por %p39, %p40
      %p42 = scmp.ne.s32.totalorder %s31, %s34
      %p43 = scmp.eq.s32.totalorder %s26, 1
      %p44 = por %p42, %p43
      %p45 = scmp.ne.s32.totalorder %s34, %s35
      %p46 = scmp.eq.s32.totalorder %s26, 0
      %p47 = por %p45, %p46
      %p48 = scmp.ne.s32.totalorder %s34, %s35
      %p49 = scmp.eq.s32.totalorder %s27, 1
      %p50 = por %p48, %p49
      %p52 = scmp.ne.s32.totalorder %s35, %s51
      %p53 = scmp.eq.s32.totalorder %s27, 0
      %p54 = por %p52, %p53
      %s56 = sadd.s32 %s55, 1
      %p59 = scmp.eq.s32.totalorder %s21, 1
      %p60 = scmp.ne.s32.totalorder %s55, %s57
      %p61 = scmp.eq.s32.totalorder %s21, 0
      %p62 = por %p60, %p61
      %p63 = scmp.ne.s32.totalorder %s55, %s57
      %p64 = scmp.eq.s32.totalorder %s26, 1
      %p65 = por %p63, %p64
      %p66 = scmp.ne.s32.totalorder %s57, %s58
      %p67 = scmp.eq.s32.totalorder %s26, 0
      %p68 = por %p66, %p67
      %p69 = scmp.ne.s32.totalorder %s57, %s58
      %p70 = scmp.eq.s32.totalorder %s27, 1
      %p71 = por %p69, %p70
      %p73 = scmp.ne.s32.totalorder %s58, %s72
      %p74 = scmp.eq.s32.totalorder %s27, 0
      %p75 = por %p73, %p74
      %s77 = sadd.s32 %s76, 1
      %p80 = scmp.eq.s32.totalorder %s21, 1
      %p81 = scmp.ne.s32.totalorder %s76, %s78
      %p82 = scmp.eq.s32.totalorder %s21, 0
      %p83 = por %p81, %p82
      %p84 = scmp.ne.s32.totalorder %s76, %s78
      %p85 = scmp.eq.s32.totalorder %s26, 1
      %p86 = por %p84, %p85
      %p87 = scmp.ne.s32.totalorder %s78, %s79
      %p88 = scmp.eq.s32.totalorder %s26, 0
      %p89 = por %p87, %p88
      %p90 = scmp.ne.s32.totalorder %s78, %s79
      %p91 = scmp.eq.s32.totalorder %s27, 1
      %p92 = por %p90, %p91
      %p94 = scmp.ne.s32.totalorder %s79, %s93
      %p95 = scmp.eq.s32.totalorder %s27, 0
      %p96 = por %p94, %p95
      %s98 = sadd.s32 %s97, 1
      %p101 = scmp.eq.s32.totalorder %s21, 1
      %p102 = scmp.ne.s32.totalorder %s97, %s99
      %p103 = scmp.eq.s32.totalorder %s21, 0
      %p104 = por %p102, %p103
      %p105 = scmp.ne.s32.totalorder %s97, %s99
      %p106 = scmp.eq.s32.totalorder %s26, 1
      %p107 = por %p105, %p106
      %p108 = scmp.ne.s32.totalorder %s99, %s100
      %p109 = scmp.eq.s32.totalorder %s26, 0
      %p110 = por %p108, %p109
      %p111 = scmp.ne.s32.totalorder %s99, %s100
      %p112 = scmp.eq.s32.totalorder %s27, 1
      %p113 = por %p111, %p112
      %p115 = scmp.ne.s32.totalorder %s100, %s114
      %p116 = scmp.eq.s32.totalorder %s27, 0
      %p117 = por %p115, %p116
      %s119 = sadd.s32 %s118, 1
      %p122 = scmp.eq.s32.totalorder %s21, 1
      %p123 = scmp.ne.s32.totalorder %s118, %s120
      %p124 = scmp.eq.s32.totalorder %s21, 0
      %p125 = por %p123, %p124
      %p126 = scmp.ne.s32.totalorder %s118, %s120
      %p127 = scmp.eq.s32.totalorder %s26, 1
      %p128 = por %p126, %p127
      %p129 = scmp.ne.s32.totalorder %s120, %s121
      %p130 = scmp.eq.s32.totalorder %s26, 0
      %p131 = por %p129, %p130
      %p132 = scmp.ne.s32.totalorder %s120, %s121
      %p133 = scmp.eq.s32.totalorder %s27, 1
      %p134 = por %p132, %p133
      %p136 = scmp.ne.s32.totalorder %s121, %s135
      %p137 = scmp.eq.s32.totalorder %s27, 0
      %p138 = por %p136, %p137
      %s140 = sadd.s32 %s139, 1
      %p143 = scmp.eq.s32.totalorder %s21, 1
      %p144 = scmp.ne.s32.totalorder %s139, %s141
      %p145 = scmp.eq.s32.totalorder %s21, 0
      %p146 = por %p144, %p145
      %p147 = scmp.ne.s32.totalorder %s139, %s141
      %p148 = scmp.eq.s32.totalorder %s26, 1
      %p149 = por %p147, %p148
      %p150 = scmp.ne.s32.totalorder %s141, %s142
      %p151 = scmp.eq.s32.totalorder %s26, 0
      %p152 = por %p150, %p151
      %p153 = scmp.ne.s32.totalorder %s141, %s142
      %p154 = scmp.eq.s32.totalorder %s27, 1
      %p155 = por %p153, %p154
      %p157 = scmp.ne.s32.totalorder %s142, %s156
      %p158 = scmp.eq.s32.totalorder %s27, 0
      %p159 = por %p157, %p158
      %s161 = sadd.s32 %s160, 1
      %p164 = scmp.eq.s32.totalorder %s21, 1
      %p165 = scmp.ne.s32.totalorder %s160, %s162
      %p166 = scmp.eq.s32.totalorder %s21, 0
      %p167 = por %p165, %p166
      %p168 = scmp.ne.s32.totalorder %s160, %s162
      %p169 = scmp.eq.s32.totalorder %s26, 1
      %p170 = por %p168, %p169
      %p171 = scmp.ne.s32.totalorder %s162, %s163
      %p172 = scmp.eq.s32.totalorder %s26, 0
      %p173 = por %p171, %p172
      %p174 = scmp.ne.s32.totalorder %s162, %s163
      %p175 = scmp.eq.s32.totalorder %s27, 1
      %p176 = por %p174, %p175
      %p178 = scmp.ne.s32.totalorder %s163, %s177
      %p179 = scmp.eq.s32.totalorder %s27, 0
      %p180 = por %p178, %p179
      %s181 = ssub.s32 %s21, %s28
      %p182 = scmp.eq.s32.totalorder %s181, 0
      %s184 = sadd.s32 %s183, 1
      %s185 = scalar_select %p182, %s183, %s184
      %p188 = pneg %p182
      %p189 = scmp.eq.s32.totalorder %s21, 1
      %p190 = por %p188, %p189
      %p191 = scmp.ne.s32.totalorder %s183, %s186
      %p192 = scmp.eq.s32.totalorder %s21, 0
      %p193 = por %p191, %p192
      %p194 = scmp.ne.s32.totalorder %s183, %s186
      %p195 = scmp.eq.s32.totalorder %s26, 1
      %p196 = por %p194, %p195
      %p197 = scmp.ne.s32.totalorder %s186, %s187
      %p198 = scmp.eq.s32.totalorder %s26, 0
      %p199 = por %p197, %p198
      %p200 = scmp.ne.s32.totalorder %s186, %s187
      %p201 = scmp.eq.s32.totalorder %s27, 1
      %p202 = por %p200, %p201
      %p204 = scmp.ne.s32.totalorder %s187, %s203
      %p205 = scmp.eq.s32.totalorder %s27, 0
      %p206 = por %p204, %p205
      %s207 = ssub.s32 %s21, %s28
      %p208 = scmp.eq.s32.totalorder %s207, 0
      %s210 = sadd.s32 %s209, 1
      %s211 = scalar_select %p208, %s209, %s210
      %p214 = pneg %p208
      %p215 = scmp.eq.s32.totalorder %s21, 1
      %p216 = por %p214, %p215
      %p217 = scmp.ne.s32.totalorder %s209, %s212
      %p218 = scmp.eq.s32.totalorder %s21, 0
      %p219 = por %p217, %p218
      %p220 = scmp.ne.s32.totalorder %s209, %s212
      %p221 = scmp.eq.s32.totalorder %s26, 1
      %p222 = por %p220, %p221
      %p223 = scmp.ne.s32.totalorder %s212, %s213
      %p224 = scmp.eq.s32.totalorder %s26, 0
      %p225 = por %p223, %p224
      %p226 = scmp.ne.s32.totalorder %s212, %s213
      %p227 = scmp.eq.s32.totalorder %s27, 1
      %p228 = por %p226, %p227
      %p230 = scmp.ne.s32.totalorder %s213, %s229
      %p231 = scmp.eq.s32.totalorder %s27, 0
      %p232 = por %p230, %p231
      %p233 = scmp.le.s32.totalorder 1, %s21
      %p234 = scmp.lt.s32.totalorder %s21, 3
      %p235 = pnand %p233, %p234
      %p236 = pneg %p235
      // Predicated region
      $region9: #{encoder_forward.1} parent=5 // pred_check
        _
      $region10: #{encoder_forward.1} parent=5 // pred_check_branch
        %238 = sbr.rel (%p235) target = $region12
      $region11: #{encoder_forward.1} parent=5 // pred_region
        %s239 = ssub.s32 %s21, 1
        // Predicated region
        $region13: #{encoder_forward.1} parent=11 // pred_check
          %p240 = pneg %p68
        $region14: #{encoder_forward.1} parent=11 // pred_check_branch
          %242 = sbr.rel (%p240) target = $region16
        $region15: #{encoder_forward.1} parent=11 // pred_region
          _
        $region16: #{encoder_forward.1} parent=11 // pred_fallthru
          _
        // Predicated region
        $region17: #{encoder_forward.1} parent=11 // pred_check
          %p243 = pneg %p89
        $region18: #{encoder_forward.1} parent=11 // pred_check_branch
          %245 = sbr.rel (%p243) target = $region20
        $region19: #{encoder_forward.1} parent=11 // pred_region
          _
        $region20: #{encoder_forward.1} parent=11 // pred_fallthru
          _
        // Predicated region
        $region21: #{encoder_forward.1} parent=11 // pred_check
          %p246 = pneg %p110
        $region22: #{encoder_forward.1} parent=11 // pred_check_branch
          %248 = sbr.rel (%p246) target = $region24
        $region23: #{encoder_forward.1} parent=11 // pred_region
          _
        $region24: #{encoder_forward.1} parent=11 // pred_fallthru
          _
        // Predicated region
        $region25: #{encoder_forward.1} parent=11 // pred_check
          %p249 = pneg %p131
        $region26: #{encoder_forward.1} parent=11 // pred_check_branch
          %251 = sbr.rel (%p249) target = $region28
        $region27: #{encoder_forward.1} parent=11 // pred_region
          _
        $region28: #{encoder_forward.1} parent=11 // pred_fallthru
          _
        // Predicated region
        $region29: #{encoder_forward.1} parent=11 // pred_check
          %p252 = pneg %p152
        $region30: #{encoder_forward.1} parent=11 // pred_check_branch
          %254 = sbr.rel (%p252) target = $region32
        $region31: #{encoder_forward.1} parent=11 // pred_region
          _
        $region32: #{encoder_forward.1} parent=11 // pred_fallthru
          _
        // Predicated region
        $region33: #{encoder_forward.1} parent=11 // pred_check
          %p255 = pneg %p173
        $region34: #{encoder_forward.1} parent=11 // pred_check_branch
          %257 = sbr.rel (%p255) target = $region36
        $region35: #{encoder_forward.1} parent=11 // pred_region
          _
        $region36: #{encoder_forward.1} parent=11 // pred_fallthru
          _
      $region12: #{encoder_forward.1} parent=5 // pred_fallthru
        _
      %p258 = scmp.lt.s32.totalorder %s21, 2
      // Predicated region
      $region37: #{encoder_forward.1} parent=5 // pred_check
        %p259 = pneg %p258
      $region38: #{encoder_forward.1} parent=5 // pred_check_branch
        %261 = sbr.rel (%p259) target = $region40
      $region39: #{encoder_forward.1} parent=5 // pred_region
        // Predicated region
        $region41: #{encoder_forward.1} parent=39 // pred_check
          %p262 = pneg %p41
        $region42: #{encoder_forward.1} parent=39 // pred_check_branch
          %264 = sbr.rel (%p262) target = $region44
        $region43: #{encoder_forward.1} parent=39 // pred_region
          %s265 = smul.u32 32, %s21
          %p266 = scmp.lt.s32.totalorder %s265, 63
          %s267 = scalar_select %p266, %s265, 63
          %s268 = smul.addr %s267, 4
          %s269 = scalar_lea.vmem %s0, %s268
          %s270 = smul.u32 32, %s21
        $region44: #{encoder_forward.1} parent=39 // pred_fallthru
          _
      $region40: #{encoder_forward.1} parent=5 // pred_fallthru
        _
      %p271 = scmp.le.s32.totalorder 1, %s21
      %p272 = scmp.lt.s32.totalorder %s21, 3
      %p273 = pnand %p271, %p272
      %p274 = pneg %p273
      // Predicated region
      $region45: #{encoder_forward.1} parent=5 // pred_check
        _
      $region46: #{encoder_forward.1} parent=5 // pred_check_branch
        %276 = sbr.rel (%p273) target = $region48
      $region47: #{encoder_forward.1} parent=5 // pred_region
        %s277 = ssub.s32 %s21, 1
        %s278 = smul.u32 32, %s26
        %p279 = scmp.lt.s32.totalorder %s278, 63
        %s280 = scalar_select %p279, %s278, 63
        %s281 = smul.addr %s280, 4
        %s282 = scalar_lea.vmem %s0, %s281
        %p283 = pneg %p47
        %p284 = pneg %p44
        %p285 = pneg %p68
        %p286 = pneg %p65
        %p287 = pneg %p89
        %p288 = pneg %p86
        %p289 = pneg %p110
        %p290 = pneg %p107
        %p291 = pneg %p131
        %p292 = pneg %p128
        %p293 = pneg %p152
        %p294 = pneg %p149
        %p295 = pneg %p173
        %p296 = pneg %p170
        %p297 = pneg %p199
        %p298 = pneg %p196
        %s299 = sand.u32 %s186, 1
        %s300 = scalar_lea.sflag [#allocation3], %s299
        %s301 = sand.u32 %s186, 1
        %s302 = smul.addr %s301, 32
        %s303 = scalar_lea.vmem [#allocation2], %s302
        %p304 = pneg %p225
        %p305 = pneg %p222
        %s306 = sand.u32 %s212, 1
        %s307 = scalar_lea.sflag [#allocation5], %s306
        %s308 = sand.u32 %s212, 1
        %s309 = smul.addr %s308, 32
        %s310 = scalar_lea.vmem [#allocation4], %s309
        %s311 = smul.u32 32, %s26
        %p312 = scmp.lt.s32.totalorder %s311, 63
        %s313 = scalar_select %p312, %s311, 63
        %s314 = smul.addr %s313, 4
        %s315 = scalar_lea.vmem %s0, %s314
        %s316 = smul.u32 32, %s26
        %s317 = smul.u32 2, %s26
        %s318 = smul.u32 2, %s26
        %v320 = vld [vmem:[%s1] sm:$0xf]
        %v321 = vld [vmem:[%s1 + $0x4] sm:$0xf]
        %v322 = vld [vmem:[%s1 + $0x8] sm:$0xf]
        %v323 = vld [vmem:[%s1 + $0xc] sm:$0xf]
        %v324 = vld [vmem:[%s1 + $0x10] sm:$0xf]
        %v325 = vld [vmem:[%s1 + $0x14] sm:$0xf]
        %v326 = vld [vmem:[%s1 + $0x18] sm:$0xf]
        %v327 = vld [vmem:[%s1 + $0x1c] sm:$0xf]
        %v328 = vld [vmem:[%s315] sm:$0xf]
        %v329 = vld [vmem:[%s315 + $0x4] sm:$0xf]
        %v330 = vld [vmem:[%s315 + $0x8] sm:$0xf]
        %v331 = vld [vmem:[%s315 + $0xc] sm:$0xf]
        %v332 = vld [vmem:[%s315 + $0x10] sm:$0xf]
        %v333 = vld [vmem:[%s315 + $0x14] sm:$0xf]
        %v334 = vld [vmem:[%s315 + $0x18] sm:$0xf]
        %v335 = vld [vmem:[%s315 + $0x1c] sm:$0xf]
        %v336 = vld [vmem:[%s315 + $0x20] sm:$0xf]
        %v337 = vld [vmem:[%s315 + $0x24] sm:$0xf]
        %v338 = vld [vmem:[%s315 + $0x28] sm:$0xf]
        %v339 = vld [vmem:[%s315 + $0x2c] sm:$0xf]
        %v340 = vld [vmem:[%s315 + $0x30] sm:$0xf]
        %v341 = vld [vmem:[%s315 + $0x34] sm:$0xf]
        %v342 = vld [vmem:[%s315 + $0x38] sm:$0xf]
        %v343 = vld [vmem:[%s315 + $0x3c] sm:$0xf]
        %v344 = vld [vmem:[%s315 + $0x40] sm:$0xf]
        %v345 = vld [vmem:[%s315 + $0x44] sm:$0xf]
        %v346 = vld [vmem:[%s315 + $0x48] sm:$0xf]
        %v347 = vld [vmem:[%s315 + $0x4c] sm:$0xf]
        %v348 = vld [vmem:[%s315 + $0x50] sm:$0xf]
        %v349 = vld [vmem:[%s315 + $0x54] sm:$0xf]
        %v350 = vld [vmem:[%s315 + $0x58] sm:$0xf]
        %v351 = vld [vmem:[%s315 + $0x5c] sm:$0xf]
        %v352 = vld [vmem:[%s315 + $0x60] sm:$0xf]
        %v353 = vld [vmem:[%s315 + $0x64] sm:$0xf]
        %v354 = vld [vmem:[%s315 + $0x68] sm:$0xf]
        %v355 = vld [vmem:[%s315 + $0x6c] sm:$0xf]
        %v356 = vld [vmem:[%s315 + $0x70] sm:$0xf]
        %v357 = vld [vmem:[%s315 + $0x74] sm:$0xf]
        %v358 = vld [vmem:[%s315 + $0x78] sm:$0xf]
        %v359 = vld [vmem:[%s315 + $0x7c] sm:$0xf]
        %v360 = vld [vmem:[%s2] sm:$0xff]
        %v361 = vld [vmem:[%s2 + $0x8] sm:$0xff]
        %v362 = vld [vmem:[%s2 + $0x10] sm:$0xff]
        %v363 = vld [vmem:[%s2 + $0x18] sm:$0xff]
        %v364 = vld [vmem:[%s2 + $0x20] sm:$0xff]
        %v365 = vld [vmem:[%s2 + $0x28] sm:$0xff]
        %v366 = vld [vmem:[%s2 + $0x30] sm:$0xff]
        %v367 = vld [vmem:[%s2 + $0x38] sm:$0xff]
        %369 = vset.pattern.permute.xlu0 0
        %370 = vperm.xlu0 %369, %v360
        %v371 = vpop.permute.xlu0 %370
        %374 = vset.pattern.permute.xlu0 0
        %375 = vperm.xlu0 %374, %v361
        %v376 = vpop.permute.xlu0 %375
        %379 = vset.pattern.permute.xlu0 0
        %380 = vperm.xlu0 %379, %v362
        %v381 = vpop.permute.xlu0 %380
        %384 = vset.pattern.permute.xlu0 0
        %385 = vperm.xlu0 %384, %v363
        %v386 = vpop.permute.xlu0 %385
        %389 = vset.pattern.permute.xlu0 0
        %390 = vperm.xlu0 %389, %v364
        %v391 = vpop.permute.xlu0 %390
        %394 = vset.pattern.permute.xlu0 0
        %395 = vperm.xlu0 %394, %v365
        %v396 = vpop.permute.xlu0 %395
        %399 = vset.pattern.permute.xlu0 0
        %400 = vperm.xlu0 %399, %v366
        %v401 = vpop.permute.xlu0 %400
        %404 = vset.pattern.permute.xlu0 0
        %405 = vperm.xlu0 %404, %v367
        %v406 = vpop.permute.xlu0 %405
        %v416 = vunpack.c.l.b16 %v320
        %v417 = vunpack.c.l.b16 %v321
        %v418 = vunpack.c.l.b16 %v322
        %v419 = vunpack.c.l.b16 %v323
        %v420 = vunpack.c.l.b16 %v324
        %v421 = vunpack.c.l.b16 %v325
        %v422 = vunpack.c.l.b16 %v326
        %v423 = vunpack.c.l.b16 %v327
        %v424 = vpack.c.b16 %v417, %v416
        %v425 = vpack.c.b16 %v419, %v418
        %v426 = vpack.c.b16 %v421, %v420
        %v427 = vpack.c.b16 %v423, %v422
        %v460 = vunpack.c.l.b16 %v328
        %v461 = vunpack.c.l.b16 %v329
        %v462 = vunpack.c.l.b16 %v330
        %v463 = vunpack.c.l.b16 %v331
        %v464 = vunpack.c.l.b16 %v332
        %v465 = vunpack.c.l.b16 %v333
        %v466 = vunpack.c.l.b16 %v334
        %v467 = vunpack.c.l.b16 %v335
        %v468 = vunpack.c.l.b16 %v336
        %v469 = vunpack.c.l.b16 %v337
        %v470 = vunpack.c.l.b16 %v338
        %v471 = vunpack.c.l.b16 %v339
        %v472 = vunpack.c.l.b16 %v340
        %v473 = vunpack.c.l.b16 %v341
        %v474 = vunpack.c.l.b16 %v342
        %v475 = vunpack.c.l.b16 %v343
        %v476 = vunpack.c.l.b16 %v344
        %v477 = vunpack.c.l.b16 %v345
        %v478 = vunpack.c.l.b16 %v346
        %v479 = vunpack.c.l.b16 %v347
        %v480 = vunpack.c.l.b16 %v348
        %v481 = vunpack.c.l.b16 %v349
        %v482 = vunpack.c.l.b16 %v350
        %v483 = vunpack.c.l.b16 %v351
        %v484 = vunpack.c.l.b16 %v352
        %v485 = vunpack.c.l.b16 %v353
        %v486 = vunpack.c.l.b16 %v354
        %v487 = vunpack.c.l.b16 %v355
        %v488 = vunpack.c.l.b16 %v356
        %v489 = vunpack.c.l.b16 %v357
        %v490 = vunpack.c.l.b16 %v358
        %v491 = vunpack.c.l.b16 %v359
        %v492 = vpack.c.b16 %v461, %v460
        %v493 = vpack.c.b16 %v463, %v462
        %v494 = vpack.c.b16 %v465, %v464
        %v495 = vpack.c.b16 %v467, %v466
        %v496 = vpack.c.b16 %v469, %v468
        %v497 = vpack.c.b16 %v471, %v470
        %v498 = vpack.c.b16 %v473, %v472
        %v499 = vpack.c.b16 %v475, %v474
        %v500 = vpack.c.b16 %v477, %v476
        %v501 = vpack.c.b16 %v479, %v478
        %v502 = vpack.c.b16 %v481, %v480
        %v503 = vpack.c.b16 %v483, %v482
        %v504 = vpack.c.b16 %v485, %v484
        %v505 = vpack.c.b16 %v487, %v486
        %v506 = vpack.c.b16 %v489, %v488
        %v507 = vpack.c.b16 %v491, %v490
        %vm508 = vcmask 261120
        %v510 = vsel %vm508, %v424, 0
        %v513 = vsel %vm508, %v425, 0
        %v516 = vsel %vm508, %v426, 0
        %v519 = vsel %vm508, %v427, 0
        %v522 = vsel %vm508, %v492, 0
        %v525 = vsel %vm508, %v493, 0
        %v528 = vsel %vm508, %v494, 0
        %v531 = vsel %vm508, %v495, 0
        %v534 = vsel %vm508, %v496, 0
        %v537 = vsel %vm508, %v497, 0
        %v540 = vsel %vm508, %v498, 0
        %v543 = vsel %vm508, %v499, 0
        %v546 = vsel %vm508, %v500, 0
        %v549 = vsel %vm508, %v501, 0
        %v552 = vsel %vm508, %v502, 0
        %v555 = vsel %vm508, %v503, 0
        %v558 = vsel %vm508, %v504, 0
        %v561 = vsel %vm508, %v505, 0
        %v564 = vsel %vm508, %v506, 0
        %v567 = vsel %vm508, %v507, 0
        %569 = vmatprep.subr.bf16.mxu0 0
        %570 = vmatpush1.bf16.xpose.msra.mxu0 %v543
        %571 = vmatprep.subr.bf16.mxu0 0
        %572 = vmatpush1.bf16.xpose.msra.mxu0 %v540
        %573 = vmatprep.subr.bf16.mxu0 0
        %574 = vmatpush1.bf16.xpose.msra.mxu0 %v537
        %575 = vmatprep.subr.bf16.mxu0 0
        %576 = vmatpush1.bf16.xpose.msra.mxu0 %v534
        %577 = vmatprep.subr.bf16.mxu0 0
        %578 = vmatpush1.bf16.xpose.msra.mxu0 %v531
        %579 = vmatprep.subr.bf16.mxu0 0
        %580 = vmatpush1.bf16.xpose.msra.mxu0 %v528
        %581 = vmatprep.subr.bf16.mxu0 0
        %582 = vmatpush1.bf16.xpose.msra.mxu0 %v525
        %583 = vmatprep.subr.bf16.mxu0 0
        %584 = vmatpush1.bf16.xpose.msra.mxu0 %v522
        %585 = vmatprep.subr.bf16.mxu0 0
        %586 = vmatpush2.bf16.xpose.msra.mxu0 %v567
        %587 = vmatprep.subr.bf16.mxu0 0
        %588 = vmatpush2.bf16.xpose.msra.mxu0 %v564
        %589 = vmatprep.subr.bf16.mxu0 0
        %590 = vmatpush2.bf16.xpose.msra.mxu0 %v561
        %591 = vmatprep.subr.bf16.mxu0 0
        %592 = vmatpush2.bf16.xpose.msra.mxu0 %v558
        %593 = vmatprep.subr.bf16.mxu0 0
        %594 = vmatpush2.bf16.xpose.msra.mxu0 %v555
        %595 = vmatprep.subr.bf16.mxu0 0
        %596 = vmatpush2.bf16.xpose.msra.mxu0 %v552
        %597 = vmatprep.subr.bf16.mxu0 0
        %598 = vmatpush2.bf16.xpose.msra.mxu0 %v549
        %599 = vmatprep.subr.bf16.mxu0 0
        %600 = vmatpush2.bf16.xpose.msra.mxu0 %v546
        %601 = vmatprep.mubr.bf16.mxu0 0
        %602 = vmatmul.mubr.bf16.gmra.mxu0 %v510
        %v603 = vpop.f32.mrf.mxu0
        %v604 = vadd.f32 %v371, %v603
        %v605 = vpop.f32.mrf.mxu0
        %v606 = vadd.f32 %v371, %v605
        %v607 = vpop.f32.mrf.mxu0
        %v608 = vadd.f32 %v376, %v607
        %v609 = vpop.f32.mrf.mxu0
        %v610 = vadd.f32 %v376, %v609
        %611 = vmatprep.mubr.bf16.mxu0 0
        %612 = vmatmul.mubr.bf16.gmra.mxu0 %v513
        %v613 = vpop.f32.mrf.mxu0
        %v614 = vadd.f32 %v381, %v613
        %v615 = vpop.f32.mrf.mxu0
        %v616 = vadd.f32 %v381, %v615
        %v617 = vpop.f32.mrf.mxu0
        %v618 = vadd.f32 %v386, %v617
        %v619 = vpop.f32.mrf.mxu0
        %v620 = vadd.f32 %v386, %v619
        %621 = vmatprep.mubr.bf16.mxu0 0
        %622 = vmatmul.mubr.bf16.gmra.mxu0 %v516
        %v623 = vpop.f32.mrf.mxu0
        %v624 = vadd.f32 %v391, %v623
        %v625 = vpop.f32.mrf.mxu0
        %v626 = vadd.f32 %v391, %v625
        %v627 = vpop.f32.mrf.mxu0
        %v628 = vadd.f32 %v396, %v627
        %v629 = vpop.f32.mrf.mxu0
        %v630 = vadd.f32 %v396, %v629
        %631 = vmatprep.mubr.bf16.mxu0 0
        %632 = vmatmul.mubr.bf16.gmra.mxu0 %v519
        %v633 = vpop.f32.mrf.mxu0
        %v634 = vadd.f32 %v401, %v633
        %v635 = vpop.f32.mrf.mxu0
        %v636 = vadd.f32 %v401, %v635
        %v637 = vpop.f32.mrf.mxu0
        %v638 = vadd.f32 %v406, %v637
        %v639 = vpop.f32.mrf.mxu0
        %v640 = vadd.f32 %v406, %v639
        %641 = vdwg.mxu0
        %v642 = vmax.f32 %v604, 0.0
        %v643 = vmax.f32 %v606, 0.0
        %v644 = vmax.f32 %v608, 0.0
        %v645 = vmax.f32 %v610, 0.0
        %v646 = vmax.f32 %v614, 0.0
        %v647 = vmax.f32 %v616, 0.0
        %v648 = vmax.f32 %v618, 0.0
        %v649 = vmax.f32 %v620, 0.0
        %v650 = vmax.f32 %v624, 0.0
        %v651 = vmax.f32 %v626, 0.0
        %v652 = vmax.f32 %v628, 0.0
        %v653 = vmax.f32 %v630, 0.0
        %v654 = vmax.f32 %v634, 0.0
        %v655 = vmax.f32 %v636, 0.0
        %v656 = vmax.f32 %v638, 0.0
        %v657 = vmax.f32 %v640, 0.0
        %v658 = vpack.c.bf16 %v644, %v642
        %v659 = vpack.c.bf16 %v645, %v643
        %v660 = vpack.c.bf16 %v648, %v646
        %v661 = vpack.c.bf16 %v649, %v647
        %v662 = vpack.c.bf16 %v652, %v650
        %v663 = vpack.c.bf16 %v653, %v651
        %v664 = vpack.c.bf16 %v656, %v654
        %v665 = vpack.c.bf16 %v657, %v655
        %v666 = vld [vmem:[%s3] sm:$0xf]
        %v667 = vld [vmem:[%s3 + $0x4] sm:$0xf]
        %v668 = vld [vmem:[%s3 + $0x8] sm:$0xf]
        %v669 = vld [vmem:[%s3 + $0xc] sm:$0xf]
        %v670 = vld [vmem:[%s3 + $0x10] sm:$0xf]
        %v671 = vld [vmem:[%s3 + $0x14] sm:$0xf]
        %v672 = vld [vmem:[%s3 + $0x18] sm:$0xf]
        %v673 = vld [vmem:[%s3 + $0x1c] sm:$0xf]
        %v674 = vld [vmem:[%s4] sm:$0xff]
        %v675 = vld [vmem:[%s4 + $0x8] sm:$0xff]
        %v676 = vld [vmem:[%s4 + $0x10] sm:$0xff]
        %v677 = vld [vmem:[%s4 + $0x18] sm:$0xff]
        %v678 = vld [vmem:[%s4 + $0x20] sm:$0xff]
        %v679 = vld [vmem:[%s4 + $0x28] sm:$0xff]
        %v680 = vld [vmem:[%s4 + $0x30] sm:$0xff]
        %v681 = vld [vmem:[%s4 + $0x38] sm:$0xff]
        %683 = vset.pattern.permute.xlu0 0
        %684 = vperm.xlu0 %683, %v674
        %v685 = vpop.permute.xlu0 %684
        %688 = vset.pattern.permute.xlu0 0
        %689 = vperm.xlu0 %688, %v675
        %v690 = vpop.permute.xlu0 %689
        %693 = vset.pattern.permute.xlu0 0
        %694 = vperm.xlu0 %693, %v676
        %v695 = vpop.permute.xlu0 %694
        %698 = vset.pattern.permute.xlu0 0
        %699 = vperm.xlu0 %698, %v677
        %v700 = vpop.permute.xlu0 %699
        %703 = vset.pattern.permute.xlu0 0
        %704 = vperm.xlu0 %703, %v678
        %v705 = vpop.permute.xlu0 %704
        %708 = vset.pattern.permute.xlu0 0
        %709 = vperm.xlu0 %708, %v679
        %v710 = vpop.permute.xlu0 %709
        %713 = vset.pattern.permute.xlu0 0
        %714 = vperm.xlu0 %713, %v680
        %v715 = vpop.permute.xlu0 %714
        %718 = vset.pattern.permute.xlu0 0
        %719 = vperm.xlu0 %718, %v681
        %v720 = vpop.permute.xlu0 %719
        %v730 = vunpack.c.l.b16 %v666
        %v731 = vunpack.c.l.b16 %v667
        %v732 = vunpack.c.l.b16 %v668
        %v733 = vunpack.c.l.b16 %v669
        %v734 = vunpack.c.l.b16 %v670
        %v735 = vunpack.c.l.b16 %v671
        %v736 = vunpack.c.l.b16 %v672
        %v737 = vunpack.c.l.b16 %v673
        %v738 = vpack.c.b16 %v731, %v730
        %v739 = vpack.c.b16 %v733, %v732
        %v740 = vpack.c.b16 %v735, %v734
        %v741 = vpack.c.b16 %v737, %v736
        %vm742 = vcmask 523264
        %v744 = vsel %vm742, %v738, 0
        %v747 = vsel %vm742, %v739, 0
        %v750 = vsel %vm742, %v740, 0
        %v753 = vsel %vm742, %v741, 0
        %755 = vmatprep.subr.bf16.mxu0 0
        %756 = vmatpush1.bf16.msra.mxu0 0
        %757 = vmatprep.subr.bf16.mxu0 0
        %758 = vmatpush1.bf16.msra.mxu0 0
        %759 = vmatprep.subr.bf16.mxu0 0
        %760 = vmatpush1.bf16.msra.mxu0 0
        %761 = vmatprep.subr.bf16.mxu0 0
        %762 = vmatpush1.bf16.msra.mxu0 0
        %763 = vmatprep.subr.bf16.mxu0 %v665
        %764 = vmatpush1.bf16.msra.mxu0 %v664
        %765 = vmatprep.subr.bf16.mxu0 %v663
        %766 = vmatpush1.bf16.msra.mxu0 %v662
        %767 = vmatprep.subr.bf16.mxu0 %v661
        %768 = vmatpush1.bf16.msra.mxu0 %v660
        %769 = vmatprep.subr.bf16.mxu0 %v659
        %770 = vmatpush1.bf16.msra.mxu0 %v658
        %771 = vmatprep.subr.bf16.mxu0 0
        %772 = vmatpush2.bf16.msra.mxu0 0
        %773 = vmatprep.subr.bf16.mxu0 0
        %774 = vmatpush2.bf16.msra.mxu0 0
        %775 = vmatprep.subr.bf16.mxu0 0
        %776 = vmatpush2.bf16.msra.mxu0 0
        %777 = vmatprep.subr.bf16.mxu0 0
        %778 = vmatpush2.bf16.msra.mxu0 0
        %779 = vmatprep.subr.bf16.mxu0 0
        %780 = vmatpush2.bf16.msra.mxu0 0
        %781 = vmatprep.subr.bf16.mxu0 0
        %782 = vmatpush2.bf16.msra.mxu0 0
        %783 = vmatprep.subr.bf16.mxu0 0
        %784 = vmatpush2.bf16.msra.mxu0 0
        %785 = vmatprep.subr.bf16.mxu0 0
        %786 = vmatpush2.bf16.msra.mxu0 0
        %787 = vmatprep.mubr.bf16.mxu0 0
        %788 = vmatmul.mubr.bf16.gmra.mxu0 %v744
        %v789 = vpop.f32.mrf.mxu0
        %v790 = vadd.f32 %v685, %v789
        %v791 = vpop.f32.mrf.mxu0
        %v792 = vadd.f32 %v685, %v791
        %v793 = vpop.f32.mrf.mxu0
        %v794 = vadd.f32 %v690, %v793
        %v795 = vpop.f32.mrf.mxu0
        %v796 = vadd.f32 %v690, %v795
        %797 = vmatprep.mubr.bf16.mxu0 0
        %798 = vmatmul.mubr.bf16.gmra.mxu0 %v747
        %v799 = vpop.f32.mrf.mxu0
        %v800 = vadd.f32 %v695, %v799
        %v801 = vpop.f32.mrf.mxu0
        %v802 = vadd.f32 %v695, %v801
        %v803 = vpop.f32.mrf.mxu0
        %v804 = vadd.f32 %v700, %v803
        %v805 = vpop.f32.mrf.mxu0
        %v806 = vadd.f32 %v700, %v805
        %807 = vmatprep.mubr.bf16.mxu0 0
        %808 = vmatmul.mubr.bf16.gmra.mxu0 %v750
        %v809 = vpop.f32.mrf.mxu0
        %v810 = vadd.f32 %v705, %v809
        %v811 = vpop.f32.mrf.mxu0
        %v812 = vadd.f32 %v705, %v811
        %v813 = vpop.f32.mrf.mxu0
        %v814 = vadd.f32 %v710, %v813
        %v815 = vpop.f32.mrf.mxu0
        %v816 = vadd.f32 %v710, %v815
        %817 = vmatprep.mubr.bf16.mxu0 0
        %818 = vmatmul.mubr.bf16.gmra.mxu0 %v753
        %v819 = vpop.f32.mrf.mxu0
        %v820 = vadd.f32 %v715, %v819
        %v821 = vpop.f32.mrf.mxu0
        %v822 = vadd.f32 %v715, %v821
        %v823 = vpop.f32.mrf.mxu0
        %v824 = vadd.f32 %v720, %v823
        %v825 = vpop.f32.mrf.mxu0
        %v826 = vadd.f32 %v720, %v825
        %827 = vdwg.mxu0
        %v828 = vmax.f32 %v790, 0.0
        %v829 = vmax.f32 %v792, 0.0
        %v830 = vmax.f32 %v794, 0.0
        %v831 = vmax.f32 %v796, 0.0
        %v832 = vmax.f32 %v800, 0.0
        %v833 = vmax.f32 %v802, 0.0
        %v834 = vmax.f32 %v804, 0.0
        %v835 = vmax.f32 %v806, 0.0
        %v836 = vmax.f32 %v810, 0.0
        %v837 = vmax.f32 %v812, 0.0
        %v838 = vmax.f32 %v814, 0.0
        %v839 = vmax.f32 %v816, 0.0
        %v840 = vmax.f32 %v820, 0.0
        %v841 = vmax.f32 %v822, 0.0
        %v842 = vmax.f32 %v824, 0.0
        %v843 = vmax.f32 %v826, 0.0
        %v844 = vpack.c.bf16 %v830, %v828
        %v845 = vpack.c.bf16 %v831, %v829
        %v846 = vpack.c.bf16 %v834, %v832
        %v847 = vpack.c.bf16 %v835, %v833
        %v848 = vpack.c.bf16 %v838, %v836
        %v849 = vpack.c.bf16 %v839, %v837
        %v850 = vpack.c.bf16 %v842, %v840
        %v851 = vpack.c.bf16 %v843, %v841
        %v852 = vld [vmem:[%s5] sm:$0xf]
        %v853 = vld [vmem:[%s5 + $0x4] sm:$0xf]
        %v854 = vld [vmem:[%s5 + $0x8] sm:$0xf]
        %v855 = vld [vmem:[%s5 + $0xc] sm:$0xf]
        %v856 = vld [vmem:[%s6] sm:$0xff]
        %v857 = vld [vmem:[%s6 + $0x8] sm:$0xff]
        %v858 = vld [vmem:[%s6 + $0x10] sm:$0xff]
        %v859 = vld [vmem:[%s6 + $0x18] sm:$0xff]
        %861 = vset.pattern.permute.xlu0 0
        %862 = vperm.xlu0 %861, %v856
        %v863 = vpop.permute.xlu0 %862
        %866 = vset.pattern.permute.xlu0 0
        %867 = vperm.xlu0 %866, %v857
        %v868 = vpop.permute.xlu0 %867
        %871 = vset.pattern.permute.xlu0 0
        %872 = vperm.xlu0 %871, %v858
        %v873 = vpop.permute.xlu0 %872
        %876 = vset.pattern.permute.xlu0 0
        %877 = vperm.xlu0 %876, %v859
        %v878 = vpop.permute.xlu0 %877
        %v884 = vunpack.c.l.b16 %v852
        %v885 = vunpack.c.l.b16 %v853
        %v886 = vunpack.c.l.b16 %v854
        %v887 = vunpack.c.l.b16 %v855
        %v888 = vpack.c.b16 %v885, %v884
        %v889 = vpack.c.b16 %v887, %v886
        %v891 = vsel %vm742, %v888, 0
        %v894 = vsel %vm742, %v889, 0
        %896 = vmatprep.subr.bf16.mxu0 0
        %897 = vmatpush1.bf16.msra.mxu0 0
        %898 = vmatprep.subr.bf16.mxu0 0
        %899 = vmatpush1.bf16.msra.mxu0 0
        %900 = vmatprep.subr.bf16.mxu0 0
        %901 = vmatpush1.bf16.msra.mxu0 0
        %902 = vmatprep.subr.bf16.mxu0 0
        %903 = vmatpush1.bf16.msra.mxu0 0
        %904 = vmatprep.subr.bf16.mxu0 %v851
        %905 = vmatpush1.bf16.msra.mxu0 %v850
        %906 = vmatprep.subr.bf16.mxu0 %v849
        %907 = vmatpush1.bf16.msra.mxu0 %v848
        %908 = vmatprep.subr.bf16.mxu0 %v847
        %909 = vmatpush1.bf16.msra.mxu0 %v846
        %910 = vmatprep.subr.bf16.mxu0 %v845
        %911 = vmatpush1.bf16.msra.mxu0 %v844
        %912 = vmatprep.subr.bf16.mxu0 0
        %913 = vmatpush2.bf16.msra.mxu0 0
        %914 = vmatprep.subr.bf16.mxu0 0
        %915 = vmatpush2.bf16.msra.mxu0 0
        %916 = vmatprep.subr.bf16.mxu0 0
        %917 = vmatpush2.bf16.msra.mxu0 0
        %918 = vmatprep.subr.bf16.mxu0 0
        %919 = vmatpush2.bf16.msra.mxu0 0
        %920 = vmatprep.subr.bf16.mxu0 0
        %921 = vmatpush2.bf16.msra.mxu0 0
        %922 = vmatprep.subr.bf16.mxu0 0
        %923 = vmatpush2.bf16.msra.mxu0 0
        %924 = vmatprep.subr.bf16.mxu0 0
        %925 = vmatpush2.bf16.msra.mxu0 0
        %926 = vmatprep.subr.bf16.mxu0 0
        %927 = vmatpush2.bf16.msra.mxu0 0
        %928 = vmatprep.mubr.bf16.mxu0 0
        %929 = vmatmul.mubr.bf16.gmra.mxu0 %v891
        %v930 = vpop.f32.mrf.mxu0
        %v931 = vadd.f32 %v863, %v930
        %v932 = vpop.f32.mrf.mxu0
        %v933 = vadd.f32 %v863, %v932
        %v934 = vpop.f32.mrf.mxu0
        %v935 = vadd.f32 %v868, %v934
        %v936 = vpop.f32.mrf.mxu0
        %v937 = vadd.f32 %v868, %v936
        %938 = vmatprep.mubr.bf16.mxu0 0
        %939 = vmatmul.mubr.bf16.gmra.mxu0 %v894
        %v940 = vpop.f32.mrf.mxu0
        %v941 = vadd.f32 %v873, %v940
        %v942 = vpop.f32.mrf.mxu0
        %v943 = vadd.f32 %v873, %v942
        %v944 = vpop.f32.mrf.mxu0
        %v945 = vadd.f32 %v878, %v944
        %v946 = vpop.f32.mrf.mxu0
        %v947 = vadd.f32 %v878, %v946
        %948 = vdwg.mxu0
        %949 = vst [vmem:[%s303] sm:$0xff] %v931
        %950 = vst [vmem:[%s303 + $0x8] sm:$0xff] %v933
        %951 = vst [vmem:[%s303 + $0x10] sm:$0xff] %v935
        %952 = vst [vmem:[%s303 + $0x18] sm:$0xff] %v937
        %v953 = vmax.f32 %v941, 0.0
        %v954 = vmax.f32 %v943, 0.0
        %v955 = vmax.f32 %v945, 0.0
        %v956 = vmax.f32 %v947, 0.0
        %v957 = vand.u32 2147483647, %v941
        %v958 = vand.u32 2147483647, %v943
        %v959 = vand.u32 2147483647, %v945
        %v960 = vand.u32 2147483647, %v947
        %v961 = vsub.f32 0.0, %v957
        %v962 = vsub.f32 0.0, %v958
        %v963 = vsub.f32 0.0, %v959
        %v964 = vsub.f32 0.0, %v960
        %v965 = vmul.f32 %v961, 1.442695
        %v966 = vpow.pop %v965
        %v967 = vmul.f32 %v962, 1.442695
        %v968 = vpow.pop %v967
        %v969 = vmul.f32 %v963, 1.442695
        %v970 = vpow.pop %v969
        %v971 = vmul.f32 %v964, 1.442695
        %v972 = vpow.pop %v971
        %v973 = vadd.f32 %v966, 1.0
        %v974 = vlog2.pop %v973
        %v975 = vmul.f32 %v974, 0.6931472
        %v976 = vmul.f32 -0.5, %v966
        %v977 = vadd.f32 %v976, 1.0
        %v978 = vmul.f32 %v977, %v966
        %v979 = vand.u32 2147483647, %v966
        %vm980 = vcmp.lt.f32.partialorder %v979, 0.0004427343
        %v981 = vsel %vm980, %v978, %v975
        %v982 = vadd.f32 %v968, 1.0
        %v983 = vlog2.pop %v982
        %v984 = vmul.f32 %v983, 0.6931472
        %v985 = vmul.f32 -0.5, %v968
        %v986 = vadd.f32 %v985, 1.0
        %v987 = vmul.f32 %v986, %v968
        %v988 = vand.u32 2147483647, %v968
        %vm989 = vcmp.lt.f32.partialorder %v988, 0.0004427343
        %v990 = vsel %vm989, %v987, %v984
        %v991 = vadd.f32 %v970, 1.0
        %v992 = vlog2.pop %v991
        %v993 = vmul.f32 %v992, 0.6931472
        %v994 = vmul.f32 -0.5, %v970
        %v995 = vadd.f32 %v994, 1.0
        %v996 = vmul.f32 %v995, %v970
        %v997 = vand.u32 2147483647, %v970
        %vm998 = vcmp.lt.f32.partialorder %v997, 0.0004427343
        %v999 = vsel %vm998, %v996, %v993
        %v1000 = vadd.f32 %v972, 1.0
        %v1001 = vlog2.pop %v1000
        %v1002 = vmul.f32 %v1001, 0.6931472
        %v1003 = vmul.f32 -0.5, %v972
        %v1004 = vadd.f32 %v1003, 1.0
        %v1005 = vmul.f32 %v1004, %v972
        %v1006 = vand.u32 2147483647, %v972
        %vm1007 = vcmp.lt.f32.partialorder %v1006, 0.0004427343
        %v1008 = vsel %vm1007, %v1005, %v1002
        %v1009 = vadd.f32 %v953, %v981
        %v1010 = vadd.f32 %v954, %v990
        %v1011 = vadd.f32 %v955, %v999
        %v1012 = vadd.f32 %v956, %v1008
        %1013 = vst [vmem:[%s310] sm:$0xff] %v1009
        %1014 = vst [vmem:[%s310 + $0x8] sm:$0xff] %v1010
        %1015 = vst [vmem:[%s310 + $0x10] sm:$0xff] %v1011
        %1016 = vst [vmem:[%s310 + $0x18] sm:$0xff] %v1012
        %s1017 = sand.u32 %s186, 1
        %s1018 = scalar_lea.sflag [#allocation3], %s1017
        %s1019 = sand.u32 %s186, 1
        %s1020 = smul.addr %s1019, 32
        %s1021 = scalar_lea.vmem [#allocation2], %s1020
        %s1022 = sand.u32 %s212, 1
        %s1023 = scalar_lea.sflag [#allocation5], %s1022
        %s1024 = sand.u32 %s212, 1
        %s1025 = smul.addr %s1024, 32
        %s1026 = scalar_lea.vmem [#allocation4], %s1025
        // Predicated region
        $region49: #{encoder_forward.1} parent=47 // pred_check
          %p1027 = pneg %p196
        $region50: #{encoder_forward.1} parent=47 // pred_check_branch
          %1029 = sbr.rel (%p1027) target = $region52
        $region51: #{encoder_forward.1} parent=47 // pred_region
          %s1030 = smul.u32 2, %s26
          %s1032 = ssub.s32 512, 512
          %1033 = vsyncadd %s1018, %s1032
          %s1034 = smul.addr %s1030, 128
          %s1035 = scalar_lea.hbm %s7, %s1034
          %s1036 = sshll.u32 %s1021, 4
          %s1037 = int_to_ptr.vmem [resolvable:$true] %s1036
          %1042 = dma.vmem_to_hbm [thread:$0]  %s1037, 512, %s1035, %s1018, 256, 512, 16
        $region52: #{encoder_forward.1} parent=47 // pred_fallthru
          _
        // Predicated region
        $region53: #{encoder_forward.1} parent=47 // pred_check
          %p1043 = pneg %p222
        $region54: #{encoder_forward.1} parent=47 // pred_check_branch
          %1045 = sbr.rel (%p1043) target = $region56
        $region55: #{encoder_forward.1} parent=47 // pred_region
          %s1046 = smul.u32 2, %s26
          %s1048 = ssub.s32 512, 512
          %1049 = vsyncadd %s1023, %s1048
          %s1050 = smul.addr %s1046, 128
          %s1051 = scalar_lea.hbm %s8, %s1050
          %s1052 = sshll.u32 %s1026, 4
          %s1053 = int_to_ptr.vmem [resolvable:$true] %s1052
          %1058 = dma.vmem_to_hbm [thread:$0]  %s1053, 512, %s1051, %s1023, 256, 512, 16
        $region56: #{encoder_forward.1} parent=47 // pred_fallthru
          _
      $region48: #{encoder_forward.1} parent=5 // pred_fallthru
        _
      %p1059 = scmp.le.s32.totalorder 2, %s21
      // Predicated region
      $region57: #{encoder_forward.1} parent=5 // pred_check
        %p1060 = pneg %p1059
      $region58: #{encoder_forward.1} parent=5 // pred_check_branch
        %1062 = sbr.rel (%p1060) target = $region60
      $region59: #{encoder_forward.1} parent=5 // pred_region
        %s1063 = ssub.s32 %s21, 2
        // Predicated region
        $region61: #{encoder_forward.1} parent=59 // pred_check
          %p1064 = pneg %p202
        $region62: #{encoder_forward.1} parent=59 // pred_check_branch
          %1066 = sbr.rel (%p1064) target = $region64
        $region63: #{encoder_forward.1} parent=59 // pred_region
          %s1067 = sand.u32 %s187, 1
          %s1068 = scalar_lea.sflag [#allocation3], %s1067
          %s1069 = sand.u32 %s187, 1
          %s1070 = smul.addr %s1069, 32
          %s1071 = scalar_lea.vmem [#allocation2], %s1070
          %1072 = dma.done %s1068, 512
        $region64: #{encoder_forward.1} parent=59 // pred_fallthru
          _
        // Predicated region
        $region65: #{encoder_forward.1} parent=59 // pred_check
          %p1073 = pneg %p228
        $region66: #{encoder_forward.1} parent=59 // pred_check_branch
          %1075 = sbr.rel (%p1073) target = $region68
        $region67: #{encoder_forward.1} parent=59 // pred_region
          %s1076 = sand.u32 %s213, 1
          %s1077 = scalar_lea.sflag [#allocation5], %s1076
          %s1078 = sand.u32 %s213, 1
          %s1079 = smul.addr %s1078, 32
          %s1080 = scalar_lea.vmem [#allocation4], %s1079
          %1081 = dma.done %s1077, 512
        $region68: #{encoder_forward.1} parent=59 // pred_fallthru
          _
      $region60: #{encoder_forward.1} parent=5 // pred_fallthru
        _
    $region6: #{encoder_forward.1} parent=1 // loop_footer
      %s25 = sadd.s32 1, %s21
    $region7: #{encoder_forward.1} parent=1 // loop_footer_branch
      %20 = sbr.rel target = $region3
    $region8: #{encoder_forward.1} parent=1 // loop_exit
      _
    %1082 = vsyncpa [#allocation3], 1
    %s1083 = scalar_lea.sflag [#allocation3], 1
    %1084 = vsyncpa %s1083, 1
    %1085 = vsyncpa [#allocation5], 1
    %s1086 = scalar_lea.sflag [#allocation5], 1
    %1087 = vsyncpa %s1086, 1

</llo_original>
